<compile_context>
chip_gen: v5e
topology: v5e:2x2
jax: 0.10.0
libtpu: 0.0.40
codegen_flags: <defaults>
</compile_context>

<pallas_src>
import jax
import jax.numpy as jnp
from jax.experimental import pallas as pl
from jax.experimental.pallas import tpu as pltpu


# ----------------------------------------------------------------------------
# Deterministic parameter construction (mirrors ExampleModel.__init__ shapes).
# UNUSED by the forward pass (identity); kept only for fidelity, never traced
# inside the hot path.
# ----------------------------------------------------------------------------
def build_params():
    key = jax.random.PRNGKey(0)
    k1, k2, k3 = jax.random.split(key, 3)
    return {
        "param1": jnp.ones((1,), jnp.float32),                        # nn.Parameter(torch.ones(1))
        "conv1_w": jax.random.normal(k1, (4, 3, 1, 1), jnp.float32),  # Conv2d(3,4,1,bias=False)
        "conv2_w": jax.random.normal(k2, (2, 4, 1, 1), jnp.float32),  # Conv2d(4,2,1)
        "conv2_b": jnp.zeros((2,), jnp.float32),
        "bn_gamma": jnp.ones((2,), jnp.float32),                      # BatchNorm2d(2)
        "bn_beta": jnp.zeros((2,), jnp.float32),
        "sub_conv1_w": jax.random.normal(k3, (2, 1, 1, 1), jnp.float32),  # Conv2d(2,2,1,groups=2)
        "sub_conv1_b": jnp.zeros((2,), jnp.float32),
        "sub_gn_gamma": jnp.ones((2,), jnp.float32),                  # GroupNorm(2,2)
        "sub_gn_beta": jnp.zeros((2,), jnp.float32),
        "sub_param1": jnp.ones((1,), jnp.float32),
    }


# ----------------------------------------------------------------------------
# Pallas identity-copy kernel (in-place capable via input/output aliasing).
# ----------------------------------------------------------------------------
def _identity_kernel(x_ref, o_ref):
    o_ref[...] = x_ref[...]


_ROW_TILE = 512  # multiple of 8; 512 x 512 f32 block = 1 MiB, double-buffered
                 # in+out = 4 MiB -> fits v5e's 16 MiB scoped VMEM default.


def _flatten_lane_dense(x):
    """Flatten to 2-D with a lane-dense (multiple-of-128) last dim if possible."""
    total = x.size
    for lanes in (512, 256, 128):
        if total % lanes == 0:
            return x.reshape(total // lanes, lanes)
    # Fallback: keep the original last dim (block last-dim == full dim is legal).
    return x.reshape(-1, x.shape[-1])


def _pallas_identity_2d(x2d):
    rows, lanes = x2d.shape
    if rows <= _ROW_TILE:
        block_rows = rows                # block == full array -> always legal
        grid = (1,)
    else:
        block_rows = _ROW_TILE           # multiple of 8; last dim lane-dense/full
        grid = (pl.cdiv(rows, _ROW_TILE),)

    return pl.pallas_call(
        _identity_kernel,
        out_shape=jax.ShapeDtypeStruct(x2d.shape, x2d.dtype),
        grid=grid,
        in_specs=[pl.BlockSpec((block_rows, lanes), lambda i: (i, 0))],
        out_specs=pl.BlockSpec((block_rows, lanes), lambda i: (i, 0)),
        # Identity: alias output to input. With a donated input this removes all
        # HBM traffic; otherwise XLA inserts exactly one copy.
        input_output_aliases={0: 0},
        compiler_params=pltpu.CompilerParams(
            dimension_semantics=("parallel",),  # lets v7x's 2 TCs split the copy
        ),
    )(x2d)


def pseudo_data_parallel_forward(params, x):
    """Forward of PseudoDataParallel: identity on x (NCHW), via a Pallas kernel."""
    del params  # forward does not touch any parameter
    n, c, h, w = x.shape
    x2d = _flatten_lane_dense(x)
    out2d = _pallas_identity_2d(x2d)
    return out2d.reshape(n, c, h, w)


if __name__ == "__main__":
    params = build_params()  # constructed once, outside the forward hot path

    # Small NCHW input consistent with the module (conv1 expects 3 input chans).
    key = jax.random.PRNGKey(0)
    x = jax.random.normal(key, (2, 3, 16, 16), jnp.float32)

    y = pseudo_data_parallel_forward(params, x)
    y = jax.block_until_ready(y)

    # Forward is identity — verify exact reproduction.
    assert y.shape == x.shape and y.dtype == x.dtype
    assert bool(jnp.all(y == x))

    print("KERNEL_OK")
</pallas_src>

<mosaic_0001>
module attributes {stable_mosaic.version = 11 : i64} {
  func.func @_identity_kernel(%arg0: i32, %arg1: memref<3x512xf32, #tpu.memory_space<vmem>>, %arg2: memref<3x512xf32, #tpu.memory_space<vmem>>) attributes {dimension_semantics = [#tpu.dimension_semantics<parallel>], iteration_bounds = array<i64: 1>, scalar_prefetch = 0 : i64, scratch_operands = 0 : i64, tpu.core_type = #tpu.core_type<tc>, window_params = [{transform_indices = @transform_0, window_bounds = array<i64: 3, 512>}, {transform_indices = @transform_1, window_bounds = array<i64: 3, 512>}]} {
    %c0 = arith.constant 0 : index
    %c0_0 = arith.constant 0 : index
    %0 = vector.load %arg1[%c0, %c0_0] : memref<3x512xf32, #tpu.memory_space<vmem>>, vector<3x512xf32>
    %c0_1 = arith.constant 0 : index
    %c0_2 = arith.constant 0 : index
    %1 = vector.load %arg2[%c0_1, %c0_2] : memref<3x512xf32, #tpu.memory_space<vmem>>, vector<3x512xf32>
    tpu.vector_store %arg2[%c0_1, %c0_2], %0 {strides = array<i32>} : memref<3x512xf32, #tpu.memory_space<vmem>>, vector<3x512xf32>,
    return
  }
  func.func @transform_0(%arg0: i32) -> (i32, i32) {
    %c0_i32 = arith.constant 0 : i32
    %c0_i32_0 = arith.constant 0 : i32
    return %arg0, %c0_i32 : i32, i32
  }
  func.func @transform_1(%arg0: i32) -> (i32, i32) {
    %c0_i32 = arith.constant 0 : i32
    %c0_i32_0 = arith.constant 0 : i32
    return %arg0, %c0_i32 : i32, i32
  }
}

</mosaic_0001>

<llo_original>
// kernel: tpu_custom_call.1
$region0: #{tpu_custom_call.1}
  #allocation0 [shape = 'u32[]', space=smem, size = 0x4, offset = 0x4, fixed_abs, tag = 'smem constant byte address 0x4 - core index']
  #allocation1 [shape = 'u32[72,128]{1,0:T(1,128)}', space=vmem, size = 0x9000, scoped, tag = 'internal scratch']
  %s0 = inlined_call_operand.hbm [shape: f32[3,512], index: 0, kind: input, shape index: {}, may-alias: {0,1}]
  %s1 = inlined_call_operand.hbm [shape: f32[3,512], index: 1, kind: output, shape index: {}, may-alias: {0,1}]
  %s2 = sld [smem:[#allocation0]]
  $region18: #{tpu_custom_call.1} parent=0
    _
  %s4 = ssub.s32 1, %s2
  %s5 = scalar_select 0, %s4, %s2
  $region1: #{tpu_custom_call.1} parent=0
    #allocation2 [shape = 'u8[8192]{0}', space=vmem, size = 0x2000, scoped, tag = 'input window, operand 0, single buffered']
    #allocation3 [shape = 's32[1]{0}', space=sflag, size = 0x4, scoped, tag = 'scoped memory for tpu_custom_call.1']
    #allocation4 [shape = 's32[1]{0}', space=sflag, size = 0x4, scoped, tag = 'scoped memory for tpu_custom_call.1']
    #allocation5 [shape = 'u8[8192]{0}', space=vmem, size = 0x2000, scoped, tag = 'output window, operand 0, single buffered']
    %6 = vsyncpa [#allocation3], 0
    %7 = vsyncpa [#allocation4], 0
    // Predicated region
    $region2: #{tpu_custom_call.1} parent=1 // pred_check
      _
    $region3: #{tpu_custom_call.1} parent=1 // pred_check_branch
      %9 = sbr.rel (0) target = $region5
    $region4: #{tpu_custom_call.1} parent=1 // pred_region
      %11 = vsyncadd [#allocation3], 0
      %s13 = sshll.u32 %s0, 4
      %s14 = int_to_ptr.hbm [resolvable:$true] %s13
      %s15 = sshll.u32 [#allocation2], 4
      %s16 = int_to_ptr.vmem [resolvable:$true] %s15
      %18 = dma.hbm_to_vmem [thread:$0]  %s14, 256, %s16, [#allocation3]
    $region5: #{tpu_custom_call.1} parent=1 // pred_fallthru
      _
    // Predicated region
    $region6: #{tpu_custom_call.1} parent=1 // pred_check
      _
    $region7: #{tpu_custom_call.1} parent=1 // pred_check_branch
      %20 = sbr.rel (0) target = $region9
    $region8: #{tpu_custom_call.1} parent=1 // pred_region
      %22 = dma.done [#allocation3], 256
    $region9: #{tpu_custom_call.1} parent=1 // pred_fallthru
      _
    %v23 = vld [vmem:[#allocation2] sm:$0x77]
    %v24 = vld [vmem:[#allocation2 + $0x8] sm:$0x77]
    %25 = vst [vmem:[#allocation5] sm:$0x77] %v23
    %26 = vst [vmem:[#allocation5 + $0x8] sm:$0x77] %v24
    // Predicated region
    $region10: #{tpu_custom_call.1} parent=1 // pred_check
      _
    $region11: #{tpu_custom_call.1} parent=1 // pred_check_branch
      %28 = sbr.rel (0) target = $region13
    $region12: #{tpu_custom_call.1} parent=1 // pred_region
      %30 = vsyncadd [#allocation4], 0
      %s32 = sshll.u32 [#allocation5], 4
      %s33 = int_to_ptr.vmem [resolvable:$true] %s32
      %s34 = sshll.u32 %s1, 4
      %s35 = int_to_ptr.hbm [resolvable:$true] %s34
      %37 = dma.vmem_to_hbm [thread:$0]  %s33, 256, %s35, [#allocation4]
    $region13: #{tpu_custom_call.1} parent=1 // pred_fallthru
      _
    // Predicated region
    $region14: #{tpu_custom_call.1} parent=1 // pred_check
      _
    $region15: #{tpu_custom_call.1} parent=1 // pred_check_branch
      %39 = sbr.rel (0) target = $region17
    $region16: #{tpu_custom_call.1} parent=1 // pred_region
      %41 = dma.done [#allocation4], 256
    $region17: #{tpu_custom_call.1} parent=1 // pred_fallthru
      _
    %42 = vsyncpa [#allocation3], 1
    %43 = vsyncpa [#allocation4], 1

</llo_original>
